<compile_context>
chip_gen: v7x
topology: tpu7x:2x2x1
jax: 0.10.0
libtpu: 0.0.40
codegen_flags: <defaults>
</compile_context>

<pallas_src>
import functools

import numpy as np
import jax
import jax.numpy as jnp
from jax import lax
from jax.experimental import pallas as pl
from jax.experimental.pallas import tpu as pltpu

D_MODEL = 32
N_HEADS = 4
HEAD = D_MODEL // N_HEADS          # 8
MLP = 4 * D_MODEL                  # 128
EPS = 1e-5


def _layernorm(x, g, b):
    mu = jnp.mean(x, axis=-1, keepdims=True)
    xc = x - mu
    var = jnp.mean(xc * xc, axis=-1, keepdims=True)
    return xc * lax.rsqrt(var + EPS) * g + b


def encoder_kernel(x_ref, mask_ref,
                   ln1g_ref, ln1b_ref,
                   wqkv_ref, bqkv_ref, wo_ref, bo_ref,
                   ln2g_ref, ln2b_ref,
                   w1_ref, b1_ref, w2_ref, b2_ref,
                   o_ref, *, bc, seq):
    x = x_ref[...]                                            # (bc*seq, D) fp32
    xn = _layernorm(x, ln1g_ref[...], ln1b_ref[...])

    # Fused QKV projection: one (bc*seq, D) @ (D, 3D) matmul + one bias add.
    qkv = jnp.dot(xn, wqkv_ref[...],
                  preferred_element_type=jnp.float32) + bqkv_ref[...]
    # (bc*seq, 3D) -> (bc, seq, 3D): splits the row (sublane) dim only.
    qkv3 = qkv.reshape(bc, seq, 3 * D_MODEL)

    # Aligned 32-lane slices (heads stay packed head-major along lanes: h*HEAD+d).
    q = qkv3[:, :, 0 * D_MODEL:1 * D_MODEL]                   # (bc, S, D)
    k = qkv3[:, :, 1 * D_MODEL:2 * D_MODEL]
    v = qkv3[:, :, 2 * D_MODEL:3 * D_MODEL]

    # Head-batched ("block-diagonal") K and V:
    #   row index  = (h, key_token) = h*seq + key
    #   lane index = (h', head_dim) = h'*HEAD + d
    # mask zeroes the off-head (h != h') blocks.  One sublane concat + one
    # constant-mask multiply each — no per-head slicing or lane reshapes.
    mask = mask_ref[...]                                      # (H*seq, D)
    bd_k = jnp.concatenate([k] * N_HEADS, axis=1) * mask      # (bc, H*S, D)
    bd_v = jnp.concatenate([v] * N_HEADS, axis=1) * mask      # (bc, H*S, D)

    scale = 1.0 / (float(HEAD) ** 0.5)
    # All-head scores in one batched matmul: s[b, q, (h,k)] = <Q_h[q], K_h[k]>.
    s = jnp.einsum('bqd,bcd->bqc', q, bd_k,
                   preferred_element_type=jnp.float32) * scale        # (bc,S,H*S)
    # torch.softmax(..., dim=1) -> normalize over the *query* axis; each
    # (head, key) lane column is normalized independently, so one softmax
    # covers all heads at once.
    s = s - jnp.max(s, axis=1, keepdims=True)
    e = jnp.exp(s)
    denom = jnp.sum(e, axis=1, keepdims=True)
    # approx=True (EUP vrcp) is the faster choice but is tolerance-gated by the
    # review; keep the exact reciprocal to hold the 1e-4 check.
    p = e * pl.reciprocal(denom, approx=False)

    # AV for all heads in one batched matmul; output lanes are already the
    # concatenated per-head outputs (h*HEAD + d), i.e. torch.cat(heads, dim=-1).
    heads = jnp.einsum('bqc,bcd->bqd', p, bd_v,
                       preferred_element_type=jnp.float32)            # (bc,S,D)
    heads2 = heads.reshape(bc * seq, D_MODEL)

    out1 = x + jnp.dot(heads2, wo_ref[...],
                       preferred_element_type=jnp.float32) + bo_ref[...]

    # MLP block.
    o1n = _layernorm(out1, ln2g_ref[...], ln2b_ref[...])
    h1 = jnp.dot(o1n, w1_ref[...],
                 preferred_element_type=jnp.float32) + b1_ref[...]
    # Exact (erf) GELU — tanh approximation is an EUP win but tolerance-gated.
    h1 = 0.5 * h1 * (1.0 + lax.erf(h1 * (2.0 ** -0.5)))
    mlp = jnp.dot(h1, w2_ref[...],
                  preferred_element_type=jnp.float32) + b2_ref[...]

    # Natural (tokens, D) layout; lane-dense (tokens*D/128, 128) output slab is
    # the next lever at large B*S (masked stores are negligible at 16 tokens).
    o_ref[...] = (out1 + mlp).astype(o_ref.dtype)


def prepare_params(params):
    """One-time parameter fusion (hoisted out of the per-forward path).

    Fuses per-head Q/K/V weights into a single (D, 3D) matrix (head-major column
    blocks, matching torch.cat(..., dim=-1)) and the biases into (1, 3D)."""
    D = D_MODEL
    wq = jnp.transpose(params["wq"], (1, 0, 2)).reshape(D, D)
    wk = jnp.transpose(params["wk"], (1, 0, 2)).reshape(D, D)
    wv = jnp.transpose(params["wv"], (1, 0, 2)).reshape(D, D)
    wqkv = jnp.concatenate([wq, wk, wv], axis=1)                      # (D, 3D)
    bqkv = jnp.concatenate([params["bq"].reshape(1, D),
                            params["bk"].reshape(1, D),
                            params["bv"].reshape(1, D)], axis=1)      # (1, 3D)
    return (params["ln1g"], params["ln1b"], wqkv, bqkv,
            params["wo"], params["bo"], params["ln2g"], params["ln2b"],
            params["w1"], params["b1"], params["w2"], params["b2"])


def _head_mask(seq):
    """Constant (N_HEADS*seq, D) block-diagonal head mask (built at trace time)."""
    row_head = np.arange(N_HEADS * seq)[:, None] // seq      # head of (h, key) row
    col_head = np.arange(D_MODEL)[None, :] // HEAD            # head of (h', d) lane
    return jnp.asarray((row_head == col_head).astype(np.float32))


def transformer_encoder(x, prepared, num_chunks=1):
    """prepared = prepare_params(params).

    num_chunks=1 collapses the grid (best on v5e/v6e and for small B*S);
    num_chunks=2 gives a 2-way 'parallel' batch split for v7x's 2 TensorCores —
    only worth it when each chunk carries >= ~1-2k tokens."""
    B, S, D = x.shape
    assert D == D_MODEL
    assert B % num_chunks == 0, "batch must divide num_chunks"
    bc = B // num_chunks
    if num_chunks > 1:
        assert (bc * S) % 8 == 0, "per-chunk token count must be a multiple of 8"

    mask = _head_mask(S)                                       # (H*S, D) constant
    weights = list(prepared)

    x_flat = x.reshape(B * S, D)

    in_specs = [pl.BlockSpec((bc * S, D), lambda c: (c, 0)),
                pl.BlockSpec(mask.shape, lambda c: (0, 0))]
    for w in weights:                        # full weights resident (constant maps)
        in_specs.append(pl.BlockSpec(w.shape, (lambda n: lambda c: (0,) * n)(w.ndim)))

    kernel = functools.partial(encoder_kernel, bc=bc, seq=S)

    out = pl.pallas_call(
        kernel,
        out_shape=jax.ShapeDtypeStruct((B * S, D), x.dtype),
        grid=(num_chunks,),
        in_specs=in_specs,
        out_specs=pl.BlockSpec((bc * S, D), lambda c: (c, 0)),
        compiler_params=pltpu.CompilerParams(
            dimension_semantics=("parallel",),
            # Safe on every generation; when scaling B*S keep live intermediates
            # comfortably under this (use ~half the v5e/v6e chunk on v7x).
            vmem_limit_bytes=32 * 1024 * 1024),
    )(x_flat, mask, *weights)
    return out.reshape(B, S, D)


def init_params(key):
    ks = list(jax.random.split(key, 16))

    def lin(k, fan_in, shape):               # PyTorch nn.Linear default init
        bound = 1.0 / (fan_in ** 0.5)
        return jax.random.uniform(k, shape, jnp.float32, -bound, bound)

    p = {}
    p["ln1g"] = jnp.ones((1, D_MODEL), jnp.float32)
    p["ln1b"] = jnp.zeros((1, D_MODEL), jnp.float32)
    p["ln2g"] = jnp.ones((1, D_MODEL), jnp.float32)
    p["ln2b"] = jnp.zeros((1, D_MODEL), jnp.float32)
    # per-head projections, stored already transposed to (in, out)
    p["wq"] = lin(ks[0], D_MODEL, (N_HEADS, D_MODEL, HEAD))
    p["bq"] = lin(ks[1], D_MODEL, (N_HEADS, HEAD))
    p["wk"] = lin(ks[2], D_MODEL, (N_HEADS, D_MODEL, HEAD))
    p["bk"] = lin(ks[3], D_MODEL, (N_HEADS, HEAD))
    p["wv"] = lin(ks[4], D_MODEL, (N_HEADS, D_MODEL, HEAD))
    p["bv"] = lin(ks[5], D_MODEL, (N_HEADS, HEAD))
    p["wo"] = lin(ks[6], D_MODEL, (D_MODEL, D_MODEL))
    p["bo"] = lin(ks[7], D_MODEL, (1, D_MODEL))
    p["w1"] = lin(ks[8], D_MODEL, (D_MODEL, MLP))
    p["b1"] = lin(ks[9], D_MODEL, (1, MLP))
    p["w2"] = lin(ks[10], MLP, (MLP, D_MODEL))
    p["b2"] = lin(ks[11], MLP, (1, D_MODEL))
    return p


def reference(x, p):
    """Pure-JAX mirror of the PyTorch forward (literal per-head concat version)."""
    def ln(v, g, b):
        mu = v.mean(-1, keepdims=True)
        var = ((v - mu) ** 2).mean(-1, keepdims=True)
        return (v - mu) / jnp.sqrt(var + EPS) * g + b

    xn = ln(x, p["ln1g"], p["ln1b"])
    heads = []
    for h in range(N_HEADS):
        q = xn @ p["wq"][h] + p["bq"][h]
        k = xn @ p["wk"][h] + p["bk"][h]
        v = xn @ p["wv"][h] + p["bv"][h]
        a = (q @ jnp.swapaxes(k, -2, -1)) / (HEAD ** 0.5)
        a = jax.nn.softmax(a, axis=1)        # dim=1, as in the PyTorch code
        heads.append(a @ v)
    mha = jnp.concatenate(heads, axis=-1) @ p["wo"] + p["bo"]
    out1 = x + mha
    o1n = ln(out1, p["ln2g"], p["ln2b"])
    h1 = o1n @ p["w1"] + p["b1"]
    h1 = 0.5 * h1 * (1.0 + lax.erf(h1 / (2.0 ** 0.5)))
    return out1 + (h1 @ p["w2"] + p["b2"])


if __name__ == "__main__":
    key = jax.random.PRNGKey(0)
    kx, kp = jax.random.split(key)
    B, S = 2, 8
    x = jax.random.normal(kx, (B, S, D_MODEL), jnp.float32)
    params = init_params(kp)
    prepared = prepare_params(params)        # one-time weight fusion (hoisted)

    out = transformer_encoder(x, prepared)
    out = jax.block_until_ready(out)

    ref = reference(x, params)
    assert out.shape == (B, S, D_MODEL)
    assert jnp.allclose(out, ref, rtol=1e-4, atol=1e-4)
    print("KERNEL_OK")
</pallas_src>

<mosaic_0001>
module attributes {stable_mosaic.version = 11 : i64} {
  func.func @encoder_kernel(%arg0: i32, %arg1: memref<16x32xf32, #tpu.memory_space<vmem>>, %arg2: memref<32x32xf32, #tpu.memory_space<vmem>>, %arg3: memref<1x32xf32, #tpu.memory_space<vmem>>, %arg4: memref<1x32xf32, #tpu.memory_space<vmem>>, %arg5: memref<32x96xf32, #tpu.memory_space<vmem>>, %arg6: memref<1x96xf32, #tpu.memory_space<vmem>>, %arg7: memref<32x32xf32, #tpu.memory_space<vmem>>, %arg8: memref<1x32xf32, #tpu.memory_space<vmem>>, %arg9: memref<1x32xf32, #tpu.memory_space<vmem>>, %arg10: memref<1x32xf32, #tpu.memory_space<vmem>>, %arg11: memref<32x128xf32, #tpu.memory_space<vmem>>, %arg12: memref<1x128xf32, #tpu.memory_space<vmem>>, %arg13: memref<128x32xf32, #tpu.memory_space<vmem>>, %arg14: memref<1x32xf32, #tpu.memory_space<vmem>>, %arg15: memref<16x32xf32, #tpu.memory_space<vmem>>) attributes {dimension_semantics = [#tpu.dimension_semantics<parallel>], iteration_bounds = array<i64: 1>, scalar_prefetch = 0 : i64, scratch_operands = 0 : i64, tpu.core_type = #tpu.core_type<tc>, window_params = [{transform_indices = @transform_0, window_bounds = array<i64: 16, 32>}, {pipeline_mode = #tpu.pipeline_mode<synchronous>, transform_indices = @transform_1, window_bounds = array<i64: 32, 32>}, {pipeline_mode = #tpu.pipeline_mode<synchronous>, transform_indices = @transform_2, window_bounds = array<i64: 1, 32>}, {pipeline_mode = #tpu.pipeline_mode<synchronous>, transform_indices = @transform_3, window_bounds = array<i64: 1, 32>}, {pipeline_mode = #tpu.pipeline_mode<synchronous>, transform_indices = @transform_4, window_bounds = array<i64: 32, 96>}, {pipeline_mode = #tpu.pipeline_mode<synchronous>, transform_indices = @transform_5, window_bounds = array<i64: 1, 96>}, {pipeline_mode = #tpu.pipeline_mode<synchronous>, transform_indices = @transform_6, window_bounds = array<i64: 32, 32>}, {pipeline_mode = #tpu.pipeline_mode<synchronous>, transform_indices = @transform_7, window_bounds = array<i64: 1, 32>}, {pipeline_mode = #tpu.pipeline_mode<synchronous>, transform_indices = @transform_8, window_bounds = array<i64: 1, 32>}, {pipeline_mode = #tpu.pipeline_mode<synchronous>, transform_indices = @transform_9, window_bounds = array<i64: 1, 32>}, {pipeline_mode = #tpu.pipeline_mode<synchronous>, transform_indices = @transform_10, window_bounds = array<i64: 32, 128>}, {pipeline_mode = #tpu.pipeline_mode<synchronous>, transform_indices = @transform_11, window_bounds = array<i64: 1, 128>}, {pipeline_mode = #tpu.pipeline_mode<synchronous>, transform_indices = @transform_12, window_bounds = array<i64: 128, 32>}, {pipeline_mode = #tpu.pipeline_mode<synchronous>, transform_indices = @transform_13, window_bounds = array<i64: 1, 32>}, {transform_indices = @transform_14, window_bounds = array<i64: 16, 32>}]} {
    %c0 = arith.constant 0 : index
    %c0_0 = arith.constant 0 : index
    %0 = vector.load %arg1[%c0, %c0_0] : memref<16x32xf32, #tpu.memory_space<vmem>>, vector<16x32xf32>
    %c0_1 = arith.constant 0 : index
    %c0_2 = arith.constant 0 : index
    %1 = vector.load %arg3[%c0_1, %c0_2] : memref<1x32xf32, #tpu.memory_space<vmem>>, vector<1x32xf32>
    %c0_3 = arith.constant 0 : index
    %c0_4 = arith.constant 0 : index
    %2 = vector.load %arg4[%c0_3, %c0_4] : memref<1x32xf32, #tpu.memory_space<vmem>>, vector<1x32xf32>
    %cst = arith.constant dense<0.000000e+00> : vector<16xf32>
    %3 = vector.multi_reduction <add>, %0, %cst [1] : vector<16x32xf32> to vector<16xf32>
    %4 = vector.shape_cast %3 : vector<16xf32> to vector<16x1xf32>
    %cst_5 = arith.constant 3.200000e+01 : f32
    %5 = vector.broadcast %cst_5 : f32 to vector<16x1xf32>
    %6 = arith.divf %4, %5 : vector<16x1xf32>
    %7 = vector.broadcast %6 : vector<16x1xf32> to vector<16x32xf32>
    %8 = arith.subf %0, %7 : vector<16x32xf32>
    %9 = arith.mulf %8, %8 : vector<16x32xf32>
    %cst_6 = arith.constant dense<0.000000e+00> : vector<16xf32>
    %10 = vector.multi_reduction <add>, %9, %cst_6 [1] : vector<16x32xf32> to vector<16xf32>
    %11 = vector.shape_cast %10 : vector<16xf32> to vector<16x1xf32>
    %cst_7 = arith.constant 3.200000e+01 : f32
    %12 = vector.broadcast %cst_7 : f32 to vector<16x1xf32>
    %13 = arith.divf %11, %12 : vector<16x1xf32>
    %cst_8 = arith.constant 9.99999974E-6 : f32
    %14 = vector.broadcast %cst_8 : f32 to vector<16x1xf32>
    %15 = arith.addf %13, %14 : vector<16x1xf32>
    %16 = math.rsqrt %15 : vector<16x1xf32>
    %17 = vector.broadcast %16 : vector<16x1xf32> to vector<16x32xf32>
    %18 = arith.mulf %8, %17 : vector<16x32xf32>
    %19 = vector.broadcast %1 : vector<1x32xf32> to vector<16x32xf32>
    %20 = arith.mulf %18, %19 : vector<16x32xf32>
    %21 = vector.broadcast %2 : vector<1x32xf32> to vector<16x32xf32>
    %22 = arith.addf %20, %21 : vector<16x32xf32>
    %c0_9 = arith.constant 0 : index
    %c0_10 = arith.constant 0 : index
    %23 = vector.load %arg5[%c0_9, %c0_10] : memref<32x96xf32, #tpu.memory_space<vmem>>, vector<32x96xf32>
    %cst_11 = arith.constant dense<0.000000e+00> : vector<16x96xf32>
    %24 = tpu.matmul %22, %23, %cst_11 {dimension_numbers = #tpu.dot_dimension_numbers<[1], [0], [0], [1], [0, 0, 1, 1], [], []>} : vector<16x32xf32>, vector<32x96xf32>, vector<16x96xf32> -> vector<16x96xf32>
    %c0_12 = arith.constant 0 : index
    %c0_13 = arith.constant 0 : index
    %25 = vector.load %arg6[%c0_12, %c0_13] : memref<1x96xf32, #tpu.memory_space<vmem>>, vector<1x96xf32>
    %26 = vector.broadcast %25 : vector<1x96xf32> to vector<16x96xf32>
    %27 = arith.addf %24, %26 : vector<16x96xf32>
    %28 = vector.shape_cast %27 : vector<16x96xf32> to vector<2x8x96xf32>
    %29 = vector.extract_strided_slice %28 {offsets = [0, 0, 0], sizes = [2, 8, 32], strides = [1, 1, 1]} : vector<2x8x96xf32> to vector<2x8x32xf32>
    %30 = vector.extract_strided_slice %28 {offsets = [0, 0, 32], sizes = [2, 8, 32], strides = [1, 1, 1]} : vector<2x8x96xf32> to vector<2x8x32xf32>
    %31 = vector.extract_strided_slice %28 {offsets = [0, 0, 64], sizes = [2, 8, 32], strides = [1, 1, 1]} : vector<2x8x96xf32> to vector<2x8x32xf32>
    %c0_14 = arith.constant 0 : index
    %c0_15 = arith.constant 0 : index
    %32 = vector.load %arg2[%c0_14, %c0_15] : memref<32x32xf32, #tpu.memory_space<vmem>>, vector<32x32xf32>
    %33 = tpu.concatenate %30, %30, %30, %30 in 1 : vector<2x8x32xf32>, vector<2x8x32xf32>, vector<2x8x32xf32>, vector<2x8x32xf32> -> vector<2x32x32xf32>
    %34 = vector.shape_cast %32 : vector<32x32xf32> to vector<1x32x32xf32>
    %35 = vector.broadcast %34 : vector<1x32x32xf32> to vector<2x32x32xf32>
    %36 = arith.mulf %33, %35 : vector<2x32x32xf32>
    %37 = tpu.concatenate %31, %31, %31, %31 in 1 : vector<2x8x32xf32>, vector<2x8x32xf32>, vector<2x8x32xf32>, vector<2x8x32xf32> -> vector<2x32x32xf32>
    %38 = vector.shape_cast %32 : vector<32x32xf32> to vector<1x32x32xf32>
    %39 = vector.broadcast %38 : vector<1x32x32xf32> to vector<2x32x32xf32>
    %40 = arith.mulf %37, %39 : vector<2x32x32xf32>
    "tpu.trace_start"() <{level = 10 : i32, message = "bqd,bcd->bqc"}> : () -> ()
    %cst_16 = arith.constant dense<0.000000e+00> : vector<2x8x32xf32>
    %41 = tpu.matmul %29, %36, %cst_16 {dimension_numbers = #tpu.dot_dimension_numbers<[2], [2], [1], [1], [0, 0, 0, 1, 1, 1], [0], [0]>} : vector<2x8x32xf32>, vector<2x32x32xf32>, vector<2x8x32xf32> -> vector<2x8x32xf32>
    "tpu.trace_stop"() : () -> ()
    %cst_17 = arith.constant 0.353553385 : f32
    %42 = vector.broadcast %cst_17 : f32 to vector<2x8x32xf32>
    %43 = arith.mulf %41, %42 : vector<2x8x32xf32>
    %cst_18 = arith.constant dense<0xFF800000> : vector<2x32xf32>
    %44 = vector.multi_reduction <maximumf>, %43, %cst_18 [1] : vector<2x8x32xf32> to vector<2x32xf32>
    %45 = vector.shape_cast %44 : vector<2x32xf32> to vector<2x1x32xf32>
    %46 = vector.broadcast %45 : vector<2x1x32xf32> to vector<2x8x32xf32>
    %47 = arith.subf %43, %46 : vector<2x8x32xf32>
    %48 = math.exp %47 : vector<2x8x32xf32>
    %cst_19 = arith.constant dense<0.000000e+00> : vector<2x32xf32>
    %49 = vector.multi_reduction <add>, %48, %cst_19 [1] : vector<2x8x32xf32> to vector<2x32xf32>
    %50 = vector.shape_cast %49 : vector<2x32xf32> to vector<2x1x32xf32>
    %51 = tpu.reciprocal %50 : vector<2x1x32xf32> -> vector<2x1x32xf32>
    %52 = vector.broadcast %51 : vector<2x1x32xf32> to vector<2x8x32xf32>
    %53 = arith.mulf %48, %52 : vector<2x8x32xf32>
    "tpu.trace_start"() <{level = 10 : i32, message = "bqc,bcd->bqd"}> : () -> ()
    %cst_20 = arith.constant dense<0.000000e+00> : vector<2x8x32xf32>
    %54 = tpu.matmul %53, %40, %cst_20 {dimension_numbers = #tpu.dot_dimension_numbers<[2], [1], [1], [2], [0, 0, 0, 1, 1, 2], [0], [0]>} : vector<2x8x32xf32>, vector<2x32x32xf32>, vector<2x8x32xf32> -> vector<2x8x32xf32>
    "tpu.trace_stop"() : () -> ()
    %55 = vector.shape_cast %54 : vector<2x8x32xf32> to vector<16x32xf32>
    %c0_21 = arith.constant 0 : index
    %c0_22 = arith.constant 0 : index
    %56 = vector.load %arg7[%c0_21, %c0_22] : memref<32x32xf32, #tpu.memory_space<vmem>>, vector<32x32xf32>
    %cst_23 = arith.constant dense<0.000000e+00> : vector<16x32xf32>
    %57 = tpu.matmul %55, %56, %cst_23 {dimension_numbers = #tpu.dot_dimension_numbers<[1], [0], [0], [1], [0, 0, 1, 1], [], []>} : vector<16x32xf32>, vector<32x32xf32>, vector<16x32xf32> -> vector<16x32xf32>
    %58 = arith.addf %0, %57 : vector<16x32xf32>
    %c0_24 = arith.constant 0 : index
    %c0_25 = arith.constant 0 : index
    %59 = vector.load %arg8[%c0_24, %c0_25] : memref<1x32xf32, #tpu.memory_space<vmem>>, vector<1x32xf32>
    %60 = vector.broadcast %59 : vector<1x32xf32> to vector<16x32xf32>
    %61 = arith.addf %58, %60 : vector<16x32xf32>
    %c0_26 = arith.constant 0 : index
    %c0_27 = arith.constant 0 : index
    %62 = vector.load %arg9[%c0_26, %c0_27] : memref<1x32xf32, #tpu.memory_space<vmem>>, vector<1x32xf32>
    %c0_28 = arith.constant 0 : index
    %c0_29 = arith.constant 0 : index
    %63 = vector.load %arg10[%c0_28, %c0_29] : memref<1x32xf32, #tpu.memory_space<vmem>>, vector<1x32xf32>
    %cst_30 = arith.constant dense<0.000000e+00> : vector<16xf32>
    %64 = vector.multi_reduction <add>, %61, %cst_30 [1] : vector<16x32xf32> to vector<16xf32>
    %65 = vector.shape_cast %64 : vector<16xf32> to vector<16x1xf32>
    %cst_31 = arith.constant 3.200000e+01 : f32
    %66 = vector.broadcast %cst_31 : f32 to vector<16x1xf32>
    %67 = arith.divf %65, %66 : vector<16x1xf32>
    %68 = vector.broadcast %67 : vector<16x1xf32> to vector<16x32xf32>
    %69 = arith.subf %61, %68 : vector<16x32xf32>
    %70 = arith.mulf %69, %69 : vector<16x32xf32>
    %cst_32 = arith.constant dense<0.000000e+00> : vector<16xf32>
    %71 = vector.multi_reduction <add>, %70, %cst_32 [1] : vector<16x32xf32> to vector<16xf32>
    %72 = vector.shape_cast %71 : vector<16xf32> to vector<16x1xf32>
    %cst_33 = arith.constant 3.200000e+01 : f32
    %73 = vector.broadcast %cst_33 : f32 to vector<16x1xf32>
    %74 = arith.divf %72, %73 : vector<16x1xf32>
    %cst_34 = arith.constant 9.99999974E-6 : f32
    %75 = vector.broadcast %cst_34 : f32 to vector<16x1xf32>
    %76 = arith.addf %74, %75 : vector<16x1xf32>
    %77 = math.rsqrt %76 : vector<16x1xf32>
    %78 = vector.broadcast %77 : vector<16x1xf32> to vector<16x32xf32>
    %79 = arith.mulf %69, %78 : vector<16x32xf32>
    %80 = vector.broadcast %62 : vector<1x32xf32> to vector<16x32xf32>
    %81 = arith.mulf %79, %80 : vector<16x32xf32>
    %82 = vector.broadcast %63 : vector<1x32xf32> to vector<16x32xf32>
    %83 = arith.addf %81, %82 : vector<16x32xf32>
    %c0_35 = arith.constant 0 : index
    %c0_36 = arith.constant 0 : index
    %84 = vector.load %arg11[%c0_35, %c0_36] : memref<32x128xf32, #tpu.memory_space<vmem>>, vector<32x128xf32>
    %cst_37 = arith.constant dense<0.000000e+00> : vector<16x128xf32>
    %85 = tpu.matmul %83, %84, %cst_37 {dimension_numbers = #tpu.dot_dimension_numbers<[1], [0], [0], [1], [0, 0, 1, 1], [], []>} : vector<16x32xf32>, vector<32x128xf32>, vector<16x128xf32> -> vector<16x128xf32>
    %c0_38 = arith.constant 0 : index
    %c0_39 = arith.constant 0 : index
    %86 = vector.load %arg12[%c0_38, %c0_39] : memref<1x128xf32, #tpu.memory_space<vmem>>, vector<1x128xf32>
    %87 = vector.broadcast %86 : vector<1x128xf32> to vector<16x128xf32>
    %88 = arith.addf %85, %87 : vector<16x128xf32>
    %cst_40 = arith.constant 5.000000e-01 : f32
    %89 = vector.broadcast %cst_40 : f32 to vector<16x128xf32>
    %90 = arith.mulf %89, %88 : vector<16x128xf32>
    %cst_41 = arith.constant 0.707106769 : f32
    %91 = vector.broadcast %cst_41 : f32 to vector<16x128xf32>
    %92 = arith.mulf %88, %91 : vector<16x128xf32>
    %93 = math.erf %92 : vector<16x128xf32>
    %cst_42 = arith.constant 1.000000e+00 : f32
    %94 = vector.broadcast %cst_42 : f32 to vector<16x128xf32>
    %95 = arith.addf %94, %93 : vector<16x128xf32>
    %96 = arith.mulf %90, %95 : vector<16x128xf32>
    %c0_43 = arith.constant 0 : index
    %c0_44 = arith.constant 0 : index
    %97 = vector.load %arg13[%c0_43, %c0_44] : memref<128x32xf32, #tpu.memory_space<vmem>>, vector<128x32xf32>
    %cst_45 = arith.constant dense<0.000000e+00> : vector<16x32xf32>
    %98 = tpu.matmul %96, %97, %cst_45 {dimension_numbers = #tpu.dot_dimension_numbers<[1], [0], [0], [1], [0, 0, 1, 1], [], []>} : vector<16x128xf32>, vector<128x32xf32>, vector<16x32xf32> -> vector<16x32xf32>
    %c0_46 = arith.constant 0 : index
    %c0_47 = arith.constant 0 : index
    %99 = vector.load %arg14[%c0_46, %c0_47] : memref<1x32xf32, #tpu.memory_space<vmem>>, vector<1x32xf32>
    %100 = vector.broadcast %99 : vector<1x32xf32> to vector<16x32xf32>
    %101 = arith.addf %98, %100 : vector<16x32xf32>
    %102 = arith.addf %61, %101 : vector<16x32xf32>
    %c0_48 = arith.constant 0 : index
    %c0_49 = arith.constant 0 : index
    %103 = vector.load %arg15[%c0_48, %c0_49] : memref<16x32xf32, #tpu.memory_space<vmem>>, vector<16x32xf32>
    tpu.vector_store %arg15[%c0_48, %c0_49], %102 {strides = array<i32>} : memref<16x32xf32, #tpu.memory_space<vmem>>, vector<16x32xf32>,
    return
  }
  func.func @transform_0(%arg0: i32) -> (i32, i32) {
    %c0_i32 = arith.constant 0 : i32
    %c0_i32_0 = arith.constant 0 : i32
    return %arg0, %c0_i32 : i32, i32
  }
  func.func @transform_1(%arg0: i32) -> (i32, i32) {
    %c0_i32 = arith.constant 0 : i32
    %c0_i32_0 = arith.constant 0 : i32
    %c0_i32_1 = arith.constant 0 : i32
    return %c0_i32, %c0_i32_0 : i32, i32
  }
  func.func @transform_2(%arg0: i32) -> (i32, i32) {
    %c0_i32 = arith.constant 0 : i32
    %c0_i32_0 = arith.constant 0 : i32
    %c0_i32_1 = arith.constant 0 : i32
    return %c0_i32, %c0_i32_0 : i32, i32
  }
  func.func @transform_3(%arg0: i32) -> (i32, i32) {
    %c0_i32 = arith.constant 0 : i32
    %c0_i32_0 = arith.constant 0 : i32
    %c0_i32_1 = arith.constant 0 : i32
    return %c0_i32, %c0_i32_0 : i32, i32
  }
  func.func @transform_4(%arg0: i32) -> (i32, i32) {
    %c0_i32 = arith.constant 0 : i32
    %c0_i32_0 = arith.constant 0 : i32
    %c0_i32_1 = arith.constant 0 : i32
    return %c0_i32, %c0_i32_0 : i32, i32
  }
  func.func @transform_5(%arg0: i32) -> (i32, i32) {
    %c0_i32 = arith.constant 0 : i32
    %c0_i32_0 = arith.constant 0 : i32
    %c0_i32_1 = arith.constant 0 : i32
    return %c0_i32, %c0_i32_0 : i32, i32
  }
  func.func @transform_6(%arg0: i32) -> (i32, i32) {
    %c0_i32 = arith.constant 0 : i32
    %c0_i32_0 = arith.constant 0 : i32
    %c0_i32_1 = arith.constant 0 : i32
    return %c0_i32, %c0_i32_0 : i32, i32
  }
  func.func @transform_7(%arg0: i32) -> (i32, i32) {
    %c0_i32 = arith.constant 0 : i32
    %c0_i32_0 = arith.constant 0 : i32
    %c0_i32_1 = arith.constant 0 : i32
    return %c0_i32, %c0_i32_0 : i32, i32
  }
  func.func @transform_8(%arg0: i32) -> (i32, i32) {
    %c0_i32 = arith.constant 0 : i32
    %c0_i32_0 = arith.constant 0 : i32
    %c0_i32_1 = arith.constant 0 : i32
    return %c0_i32, %c0_i32_0 : i32, i32
  }
  func.func @transform_9(%arg0: i32) -> (i32, i32) {
    %c0_i32 = arith.constant 0 : i32
    %c0_i32_0 = arith.constant 0 : i32
    %c0_i32_1 = arith.constant 0 : i32
    return %c0_i32, %c0_i32_0 : i32, i32
  }
  func.func @transform_10(%arg0: i32) -> (i32, i32) {
    %c0_i32 = arith.constant 0 : i32
    %c0_i32_0 = arith.constant 0 : i32
    %c0_i32_1 = arith.constant 0 : i32
    return %c0_i32, %c0_i32_0 : i32, i32
  }
  func.func @transform_11(%arg0: i32) -> (i32, i32) {
    %c0_i32 = arith.constant 0 : i32
    %c0_i32_0 = arith.constant 0 : i32
    %c0_i32_1 = arith.constant 0 : i32
    return %c0_i32, %c0_i32_0 : i32, i32
  }
  func.func @transform_12(%arg0: i32) -> (i32, i32) {
    %c0_i32 = arith.constant 0 : i32
    %c0_i32_0 = arith.constant 0 : i32
    %c0_i32_1 = arith.constant 0 : i32
    return %c0_i32, %c0_i32_0 : i32, i32
  }
  func.func @transform_13(%arg0: i32) -> (i32, i32) {
    %c0_i32 = arith.constant 0 : i32
    %c0_i32_0 = arith.constant 0 : i32
    %c0_i32_1 = arith.constant 0 : i32
    return %c0_i32, %c0_i32_0 : i32, i32
  }
  func.func @transform_14(%arg0: i32) -> (i32, i32) {
    %c0_i32 = arith.constant 0 : i32
    %c0_i32_0 = arith.constant 0 : i32
    return %arg0, %c0_i32 : i32, i32
  }
}

</mosaic_0001>

<llo_original>
// kernel: tpu_custom_call.1
$region0: #{tpu_custom_call.1}
  #allocation0 [shape = 'u32[]', space=smem, size = 0x4, offset = 0x4, fixed_abs, tag = 'smem constant byte address 0x4 - core index']
  #allocation1 [shape = 'u32[144,128]{1,0:T(1,128)}', space=vmem, size = 0x12000, scoped, tag = 'internal scratch']
  %s0 = inlined_call_operand.vmem [shape: f32[16,32], index: 0, kind: input, shape index: {}]
  %s1 = inlined_call_operand.vmem [shape: f32[32,32], index: 1, kind: input, shape index: {}]
  %s2 = inlined_call_operand.vmem [shape: f32[1,32], index: 2, kind: input, shape index: {}]
  %s3 = inlined_call_operand.vmem [shape: f32[1,32], index: 3, kind: input, shape index: {}]
  %s4 = inlined_call_operand.vmem [shape: f32[32,96], index: 4, kind: input, shape index: {}]
  %s5 = inlined_call_operand.vmem [shape: f32[1,96], index: 5, kind: input, shape index: {}]
  %s6 = inlined_call_operand.vmem [shape: f32[32,32], index: 6, kind: input, shape index: {}]
  %s7 = inlined_call_operand.vmem [shape: f32[1,32], index: 7, kind: input, shape index: {}]
  %s8 = inlined_call_operand.vmem [shape: f32[1,32], index: 8, kind: input, shape index: {}]
  %s9 = inlined_call_operand.vmem [shape: f32[1,32], index: 9, kind: input, shape index: {}]
  %s10 = inlined_call_operand.vmem [shape: f32[32,128], index: 10, kind: input, shape index: {}]
  %s11 = inlined_call_operand.vmem [shape: f32[1,128], index: 11, kind: input, shape index: {}]
  %s12 = inlined_call_operand.vmem [shape: f32[128,32], index: 12, kind: input, shape index: {}]
  %s13 = inlined_call_operand.vmem [shape: f32[1,32], index: 13, kind: input, shape index: {}]
  %s14 = inlined_call_operand.hbm [shape: f32[16,32], index: 14, kind: output, shape index: {}]
  %s15 = sld [smem:[#allocation0]]
  $region66: #{tpu_custom_call.1} parent=0
    _
  %s17 = ssub.s32 1, %s15
  %s18 = scalar_select 0, %s17, %s15
  $region1: #{tpu_custom_call.1} parent=0
    #allocation2 [shape = 'u8[8192]{0}', space=vmem, size = 0x2000, scoped, tag = 'output window, operand 0, single buffered']
    #allocation3 [shape = 's32[1]{0}', space=sflag, size = 0x4, scoped, tag = 'scoped memory for tpu_custom_call.1']
    %19 = vsyncpa [#allocation3], 0
    // Predicated region
    $region2: #{tpu_custom_call.1} parent=1 // pred_check
      _
    $region3: #{tpu_custom_call.1} parent=1 // pred_check_branch
      %21 = sbr.rel (0) target = $region5
    $region4: #{tpu_custom_call.1} parent=1 // pred_region
      _
    $region5: #{tpu_custom_call.1} parent=1 // pred_fallthru
      _
    // Predicated region
    $region6: #{tpu_custom_call.1} parent=1 // pred_check
      _
    $region7: #{tpu_custom_call.1} parent=1 // pred_check_branch
      %23 = sbr.rel (0) target = $region9
    $region8: #{tpu_custom_call.1} parent=1 // pred_region
      _
    $region9: #{tpu_custom_call.1} parent=1 // pred_fallthru
      _
    // Predicated region
    $region10: #{tpu_custom_call.1} parent=1 // pred_check
      _
    $region11: #{tpu_custom_call.1} parent=1 // pred_check_branch
      %25 = sbr.rel (0) target = $region13
    $region12: #{tpu_custom_call.1} parent=1 // pred_region
      _
    $region13: #{tpu_custom_call.1} parent=1 // pred_fallthru
      _
    // Predicated region
    $region14: #{tpu_custom_call.1} parent=1 // pred_check
      _
    $region15: #{tpu_custom_call.1} parent=1 // pred_check_branch
      %27 = sbr.rel (0) target = $region17
    $region16: #{tpu_custom_call.1} parent=1 // pred_region
      _
    $region17: #{tpu_custom_call.1} parent=1 // pred_fallthru
      _
    // Predicated region
    $region18: #{tpu_custom_call.1} parent=1 // pred_check
      _
    $region19: #{tpu_custom_call.1} parent=1 // pred_check_branch
      %29 = sbr.rel (0) target = $region21
    $region20: #{tpu_custom_call.1} parent=1 // pred_region
      _
    $region21: #{tpu_custom_call.1} parent=1 // pred_fallthru
      _
    // Predicated region
    $region22: #{tpu_custom_call.1} parent=1 // pred_check
      _
    $region23: #{tpu_custom_call.1} parent=1 // pred_check_branch
      %31 = sbr.rel (0) target = $region25
    $region24: #{tpu_custom_call.1} parent=1 // pred_region
      _
    $region25: #{tpu_custom_call.1} parent=1 // pred_fallthru
      _
    // Predicated region
    $region26: #{tpu_custom_call.1} parent=1 // pred_check
      _
    $region27: #{tpu_custom_call.1} parent=1 // pred_check_branch
      %33 = sbr.rel (0) target = $region29
    $region28: #{tpu_custom_call.1} parent=1 // pred_region
      _
    $region29: #{tpu_custom_call.1} parent=1 // pred_fallthru
      _
    // Predicated region
    $region30: #{tpu_custom_call.1} parent=1 // pred_check
      _
    $region31: #{tpu_custom_call.1} parent=1 // pred_check_branch
      %35 = sbr.rel (0) target = $region33
    $region32: #{tpu_custom_call.1} parent=1 // pred_region
      _
    $region33: #{tpu_custom_call.1} parent=1 // pred_fallthru
      _
    // Predicated region
    $region34: #{tpu_custom_call.1} parent=1 // pred_check
      _
    $region35: #{tpu_custom_call.1} parent=1 // pred_check_branch
      %37 = sbr.rel (0) target = $region37
    $region36: #{tpu_custom_call.1} parent=1 // pred_region
      _
    $region37: #{tpu_custom_call.1} parent=1 // pred_fallthru
      _
    // Predicated region
    $region38: #{tpu_custom_call.1} parent=1 // pred_check
      _
    $region39: #{tpu_custom_call.1} parent=1 // pred_check_branch
      %39 = sbr.rel (0) target = $region41
    $region40: #{tpu_custom_call.1} parent=1 // pred_region
      _
    $region41: #{tpu_custom_call.1} parent=1 // pred_fallthru
      _
    // Predicated region
    $region42: #{tpu_custom_call.1} parent=1 // pred_check
      _
    $region43: #{tpu_custom_call.1} parent=1 // pred_check_branch
      %41 = sbr.rel (0) target = $region45
    $region44: #{tpu_custom_call.1} parent=1 // pred_region
      _
    $region45: #{tpu_custom_call.1} parent=1 // pred_fallthru
      _
    // Predicated region
    $region46: #{tpu_custom_call.1} parent=1 // pred_check
      _
    $region47: #{tpu_custom_call.1} parent=1 // pred_check_branch
      %43 = sbr.rel (0) target = $region49
    $region48: #{tpu_custom_call.1} parent=1 // pred_region
      _
    $region49: #{tpu_custom_call.1} parent=1 // pred_fallthru
      _
    // Predicated region
    $region50: #{tpu_custom_call.1} parent=1 // pred_check
      _
    $region51: #{tpu_custom_call.1} parent=1 // pred_check_branch
      %45 = sbr.rel (0) target = $region53
    $region52: #{tpu_custom_call.1} parent=1 // pred_region
      _
    $region53: #{tpu_custom_call.1} parent=1 // pred_fallthru
      _
    // Predicated region
    $region54: #{tpu_custom_call.1} parent=1 // pred_check
      _
    $region55: #{tpu_custom_call.1} parent=1 // pred_check_branch
      %47 = sbr.rel (0) target = $region57
    $region56: #{tpu_custom_call.1} parent=1 // pred_region
      _
    $region57: #{tpu_custom_call.1} parent=1 // pred_fallthru
      _
    %v48 = vld [vmem:[%s0] sm:$0xff]
    %v49 = vld [vmem:[%s0 + $0x8] sm:$0xff]
    %v50 = vld [vmem:[%s2] sm:$0x1]
    %v51 = vld [vmem:[%s3] sm:$0x1]
    %vm52 = vcmask 261120
    %v53 = vsel %vm52, %v48, 0.0
    %54 = vadd.xlane.f32.xlu0 %v53
    %v55 = vpop.xlane.xlu0 %54
    %v56 = vsel %vm52, %v49, 0.0
    %57 = vadd.xlane.f32.xlu0 %v56
    %v58 = vpop.xlane.xlu0 %57
    %v59 = vrcp.pop 32.0
    %v60 = vmul.f32 %v55, %v59
    %v61 = vmul.f32 %v58, %v59
    %v62 = vsub.f32 %v48, %v60
    %v63 = vsub.f32 %v49, %v61
    %v64 = vmul.f32 %v62, %v62
    %v65 = vmul.f32 %v63, %v63
    %v66 = vsel %vm52, %v64, 0.0
    %67 = vadd.xlane.f32.xlu0 %v66
    %v68 = vpop.xlane.xlu0 %67
    %v69 = vsel %vm52, %v65, 0.0
    %70 = vadd.xlane.f32.xlu0 %v69
    %v71 = vpop.xlane.xlu0 %70
    %v72 = vmul.f32 %v68, %v59
    %v73 = vmul.f32 %v71, %v59
    %v74 = vadd.f32 %v72, 1e-05
    %v75 = vadd.f32 %v73, 1e-05
    %v76 = vrsqrt.pop %v74
    %v77 = vrsqrt.pop %v75
    %v78 = vmul.f32 %v62, %v76
    %v79 = vmul.f32 %v63, %v77
    %v81 = vlaneseq
    %v82 = vshrl.u32 %v81, 7
    %v83 = vsub.s32 0, %v82
    %v84 = vrot.slane %v50, %v83
    %v86 = vmul.f32 %v78, %v84
    %v87 = vmul.f32 %v79, %v84
    %v89 = vlaneseq
    %v90 = vshrl.u32 %v89, 7
    %v91 = vsub.s32 0, %v90
    %v92 = vrot.slane %v51, %v91
    %v94 = vadd.f32 %v86, %v92
    %v95 = vadd.f32 %v87, %v92
    %v96 = vld [vmem:[%s4] sm:$0xff]
    %v97 = vld [vmem:[%s4 + $0x8] sm:$0xff]
    %v98 = vld [vmem:[%s4 + $0x10] sm:$0xff]
    %v99 = vld [vmem:[%s4 + $0x18] sm:$0xff]
    %v100 = vld [vmem:[%s5] sm:$0x1]
    %v102 = vlaneseq
    %v103 = vshrl.u32 %v102, 7
    %v104 = vsub.s32 0, %v103
    %v105 = vrot.slane %v100, %v104
    %v108 = vsel %vm52, %v94, 0
    %v111 = vsel %vm52, %v95, 0
    %113 = vmatprep.subr.mxu0 0.0
    %114 = vmatpush1.msra.mxu0 %v96
    %115 = vmatprep.subr.mxu0 0.0
    %116 = vmatpush1.msra.mxu0 %v97
    %117 = vmatprep.subr.mxu0 0.0
    %118 = vmatpush1.msra.mxu0 %v98
    %119 = vmatprep.subr.mxu0 0.0
    %120 = vmatpush1.msra.mxu0 %v99
    %121 = vmatprep.subr.mxu0 0.0
    %122 = vmatpush1.msra.mxu0 0.0
    %123 = vmatprep.subr.mxu0 0.0
    %124 = vmatpush1.msra.mxu0 0.0
    %125 = vmatprep.subr.mxu0 0.0
    %126 = vmatpush1.msra.mxu0 0.0
    %127 = vmatprep.subr.mxu0 0.0
    %128 = vmatpush1.msra.mxu0 0.0
    %129 = vmatprep.subr.mxu0 0.0
    %130 = vmatpush1.msra.mxu0 0.0
    %131 = vmatprep.subr.mxu0 0.0
    %132 = vmatpush1.msra.mxu0 0.0
    %133 = vmatprep.subr.mxu0 0.0
    %134 = vmatpush1.msra.mxu0 0.0
    %135 = vmatprep.subr.mxu0 0.0
    %136 = vmatpush1.msra.mxu0 0.0
    %137 = vmatprep.subr.mxu0 0.0
    %138 = vmatpush1.msra.mxu0 0.0
    %139 = vmatprep.subr.mxu0 0.0
    %140 = vmatpush1.msra.mxu0 0.0
    %141 = vmatprep.subr.mxu0 0.0
    %142 = vmatpush1.msra.mxu0 0.0
    %143 = vmatprep.subr.mxu0 0.0
    %144 = vmatpush1.msra.mxu0 0.0
    %145 = vmatprep.subr.mxu0 0.0
    %146 = vmatpush1.msra.mxu0 0.0
    %147 = vmatprep.subr.mxu0 0.0
    %148 = vmatpush1.msra.mxu0 0.0
    %149 = vmatprep.subr.mxu0 0.0
    %150 = vmatpush1.msra.mxu0 0.0
    %151 = vmatprep.subr.mxu0 0.0
    %152 = vmatpush1.msra.mxu0 0.0
    %153 = vmatprep.subr.mxu0 0.0
    %154 = vmatpush1.msra.mxu0 0.0
    %155 = vmatprep.subr.mxu0 0.0
    %156 = vmatpush1.msra.mxu0 0.0
    %157 = vmatprep.subr.mxu0 0.0
    %158 = vmatpush1.msra.mxu0 0.0
    %159 = vmatprep.subr.mxu0 0.0
    %160 = vmatpush1.msra.mxu0 0.0
    %161 = vmatprep.subr.mxu0 0.0
    %162 = vmatpush1.msra.mxu0 0.0
    %163 = vmatprep.subr.mxu0 0.0
    %164 = vmatpush1.msra.mxu0 0.0
    %165 = vmatprep.subr.mxu0 0.0
    %166 = vmatpush1.msra.mxu0 0.0
    %167 = vmatprep.subr.mxu0 0.0
    %168 = vmatpush1.msra.mxu0 0.0
    %169 = vmatprep.subr.mxu0 0.0
    %170 = vmatpush1.msra.mxu0 0.0
    %171 = vmatprep.subr.mxu0 0.0
    %172 = vmatpush1.msra.mxu0 0.0
    %173 = vmatprep.subr.mxu0 0.0
    %174 = vmatpush1.msra.mxu0 0.0
    %175 = vmatprep.subr.mxu0 0.0
    %176 = vmatpush1.msra.mxu0 0.0
    %177 = vmatprep.mubr.f32.mxu0 0.0
    %178 = vmatmul.mubr.f32.gmra.mrb[0].mxu0 %v108
    %v179 = vpop.f32.mrb[0].mxu0
    %v180 = vadd.f32 %v105, %v179
    %v181 = vpop.f32.mrb[0].mxu0
    %182 = vmatprep.mubr.f32.mxu0 0.0
    %183 = vmatmul.mubr.f32.gmra.mrb[0].mxu0 %v111
    %v184 = vpop.f32.mrb[0].mxu0
    %v185 = vadd.f32 %v105, %v184
    %v186 = vpop.f32.mrb[0].mxu0
    %187 = vdwg.mxu0
    %v188 = vld [vmem:[%s1] sm:$0xff]
    %v189 = vld [vmem:[%s1 + $0x8] sm:$0xff]
    %v190 = vld [vmem:[%s1 + $0x10] sm:$0xff]
    %v191 = vld [vmem:[%s1 + $0x18] sm:$0xff]
    %196 = vrot.lane.b32.xlu0 %v188, 32
    %v197 = vpop.permute.xlu0 %196
    %198 = vrot.lane.b32.xlu0 %v189, 32
    %v199 = vpop.permute.xlu0 %198
    %200 = vrot.lane.b32.xlu0 %v190, 32
    %v201 = vpop.permute.xlu0 %200
    %202 = vrot.lane.b32.xlu0 %v191, 32
    %v203 = vpop.permute.xlu0 %202
    %v208 = vmul.f32 %v180, %v197
    %v209 = vmul.f32 %v180, %v199
    %v210 = vmul.f32 %v180, %v201
    %v211 = vmul.f32 %v180, %v203
    %v212 = vmul.f32 %v185, %v197
    %v213 = vmul.f32 %v185, %v199
    %v214 = vmul.f32 %v185, %v201
    %v215 = vmul.f32 %v185, %v203
    %216 = vrot.lane.b32.xlu0 %v188, 64
    %v217 = vpop.permute.xlu0 %216
    %218 = vrot.lane.b32.xlu0 %v189, 64
    %v219 = vpop.permute.xlu0 %218
    %220 = vrot.lane.b32.xlu0 %v190, 64
    %v221 = vpop.permute.xlu0 %220
    %222 = vrot.lane.b32.xlu0 %v191, 64
    %v223 = vpop.permute.xlu0 %222
    %v228 = vmul.f32 %v180, %v217
    %v229 = vmul.f32 %v180, %v219
    %v230 = vmul.f32 %v180, %v221
    %v231 = vmul.f32 %v180, %v223
    %v232 = vmul.f32 %v185, %v217
    %v233 = vmul.f32 %v185, %v219
    %v234 = vmul.f32 %v185, %v221
    %v235 = vmul.f32 %v185, %v223
    %240 = vrot.lane.b32.xlu0 %v208, 96
    %v241 = vpop.permute.xlu0 %240
    %242 = vrot.lane.b32.xlu0 %v209, 96
    %v243 = vpop.permute.xlu0 %242
    %244 = vrot.lane.b32.xlu0 %v210, 96
    %v245 = vpop.permute.xlu0 %244
    %246 = vrot.lane.b32.xlu0 %v211, 96
    %v247 = vpop.permute.xlu0 %246
    %v249 = vsel %vm52, %v180, 0
    %v251 = vsel %vm52, %v241, 0
    %v253 = vsel %vm52, %v243, 0
    %v255 = vsel %vm52, %v245, 0
    %v257 = vsel %vm52, %v247, 0
    %259 = vmatprep.subr.mxu0 0.0
    %260 = vmatpush1.xpose.msra.mxu0 %v251
    %261 = vmatprep.subr.mxu0 0.0
    %262 = vmatpush1.xpose.msra.mxu0 %v253
    %263 = vmatprep.subr.mxu0 0.0
    %264 = vmatpush1.xpose.msra.mxu0 %v255
    %265 = vmatprep.subr.mxu0 0.0
    %266 = vmatpush1.xpose.msra.mxu0 %v257
    %267 = vmatprep.subr.mxu0 0.0
    %268 = vmatpush1.xpose.msra.mxu0 0.0
    %269 = vmatprep.subr.mxu0 0.0
    %270 = vmatpush1.xpose.msra.mxu0 0.0
    %271 = vmatprep.subr.mxu0 0.0
    %272 = vmatpush1.xpose.msra.mxu0 0.0
    %273 = vmatprep.subr.mxu0 0.0
    %274 = vmatpush1.xpose.msra.mxu0 0.0
    %275 = vmatprep.subr.mxu0 0.0
    %276 = vmatpush1.xpose.msra.mxu0 0.0
    %277 = vmatprep.subr.mxu0 0.0
    %278 = vmatpush1.xpose.msra.mxu0 0.0
    %279 = vmatprep.subr.mxu0 0.0
    %280 = vmatpush1.xpose.msra.mxu0 0.0
    %281 = vmatprep.subr.mxu0 0.0
    %282 = vmatpush1.xpose.msra.mxu0 0.0
    %283 = vmatprep.subr.mxu0 0.0
    %284 = vmatpush1.xpose.msra.mxu0 0.0
    %285 = vmatprep.subr.mxu0 0.0
    %286 = vmatpush1.xpose.msra.mxu0 0.0
    %287 = vmatprep.subr.mxu0 0.0
    %288 = vmatpush1.xpose.msra.mxu0 0.0
    %289 = vmatprep.subr.mxu0 0.0
    %290 = vmatpush1.xpose.msra.mxu0 0.0
    %291 = vmatprep.subr.mxu0 0.0
    %292 = vmatpush1.xpose.msra.mxu0 0.0
    %293 = vmatprep.subr.mxu0 0.0
    %294 = vmatpush1.xpose.msra.mxu0 0.0
    %295 = vmatprep.subr.mxu0 0.0
    %296 = vmatpush1.xpose.msra.mxu0 0.0
    %297 = vmatprep.subr.mxu0 0.0
    %298 = vmatpush1.xpose.msra.mxu0 0.0
    %299 = vmatprep.subr.mxu0 0.0
    %300 = vmatpush1.xpose.msra.mxu0 0.0
    %301 = vmatprep.subr.mxu0 0.0
    %302 = vmatpush1.xpose.msra.mxu0 0.0
    %303 = vmatprep.subr.mxu0 0.0
    %304 = vmatpush1.xpose.msra.mxu0 0.0
    %305 = vmatprep.subr.mxu0 0.0
    %306 = vmatpush1.xpose.msra.mxu0 0.0
    %307 = vmatprep.subr.mxu0 0.0
    %308 = vmatpush1.xpose.msra.mxu0 0.0
    %309 = vmatprep.subr.mxu0 0.0
    %310 = vmatpush1.xpose.msra.mxu0 0.0
    %311 = vmatprep.subr.mxu0 0.0
    %312 = vmatpush1.xpose.msra.mxu0 0.0
    %313 = vmatprep.subr.mxu0 0.0
    %314 = vmatpush1.xpose.msra.mxu0 0.0
    %315 = vmatprep.subr.mxu0 0.0
    %316 = vmatpush1.xpose.msra.mxu0 0.0
    %317 = vmatprep.subr.mxu0 0.0
    %318 = vmatpush1.xpose.msra.mxu0 0.0
    %319 = vmatprep.subr.mxu0 0.0
    %320 = vmatpush1.xpose.msra.mxu0 0.0
    %321 = vmatprep.subr.mxu0 0.0
    %322 = vmatpush1.xpose.msra.mxu0 0.0
    %323 = vmatprep.mubr.f32.mxu0 0.0
    %324 = vmatmul.mubr.f32.gmra.mrb[0].mxu0 %v249
    %v325 = vpop.f32.mrb[0].mxu0
    %v326 = vadd.f32 0.0, %v325
    %v327 = vpop.f32.mrb[0].mxu0
    %328 = vdwg.mxu0
    %333 = vrot.lane.b32.xlu0 %v212, 96
    %v334 = vpop.permute.xlu0 %333
    %335 = vrot.lane.b32.xlu0 %v213, 96
    %v336 = vpop.permute.xlu0 %335
    %337 = vrot.lane.b32.xlu0 %v214, 96
    %v338 = vpop.permute.xlu0 %337
    %339 = vrot.lane.b32.xlu0 %v215, 96
    %v340 = vpop.permute.xlu0 %339
    %v342 = vsel %vm52, %v185, 0
    %v344 = vsel %vm52, %v334, 0
    %v346 = vsel %vm52, %v336, 0
    %v348 = vsel %vm52, %v338, 0
    %v350 = vsel %vm52, %v340, 0
    %352 = vmatprep.subr.mxu0 0.0
    %353 = vmatpush1.xpose.msra.mxu0 %v344
    %354 = vmatprep.subr.mxu0 0.0
    %355 = vmatpush1.xpose.msra.mxu0 %v346
    %356 = vmatprep.subr.mxu0 0.0
    %357 = vmatpush1.xpose.msra.mxu0 %v348
    %358 = vmatprep.subr.mxu0 0.0
    %359 = vmatpush1.xpose.msra.mxu0 %v350
    %360 = vmatprep.subr.mxu0 0.0
    %361 = vmatpush1.xpose.msra.mxu0 0.0
    %362 = vmatprep.subr.mxu0 0.0
    %363 = vmatpush1.xpose.msra.mxu0 0.0
    %364 = vmatprep.subr.mxu0 0.0
    %365 = vmatpush1.xpose.msra.mxu0 0.0
    %366 = vmatprep.subr.mxu0 0.0
    %367 = vmatpush1.xpose.msra.mxu0 0.0
    %368 = vmatprep.subr.mxu0 0.0
    %369 = vmatpush1.xpose.msra.mxu0 0.0
    %370 = vmatprep.subr.mxu0 0.0
    %371 = vmatpush1.xpose.msra.mxu0 0.0
    %372 = vmatprep.subr.mxu0 0.0
    %373 = vmatpush1.xpose.msra.mxu0 0.0
    %374 = vmatprep.subr.mxu0 0.0
    %375 = vmatpush1.xpose.msra.mxu0 0.0
    %376 = vmatprep.subr.mxu0 0.0
    %377 = vmatpush1.xpose.msra.mxu0 0.0
    %378 = vmatprep.subr.mxu0 0.0
    %379 = vmatpush1.xpose.msra.mxu0 0.0
    %380 = vmatprep.subr.mxu0 0.0
    %381 = vmatpush1.xpose.msra.mxu0 0.0
    %382 = vmatprep.subr.mxu0 0.0
    %383 = vmatpush1.xpose.msra.mxu0 0.0
    %384 = vmatprep.subr.mxu0 0.0
    %385 = vmatpush1.xpose.msra.mxu0 0.0
    %386 = vmatprep.subr.mxu0 0.0
    %387 = vmatpush1.xpose.msra.mxu0 0.0
    %388 = vmatprep.subr.mxu0 0.0
    %389 = vmatpush1.xpose.msra.mxu0 0.0
    %390 = vmatprep.subr.mxu0 0.0
    %391 = vmatpush1.xpose.msra.mxu0 0.0
    %392 = vmatprep.subr.mxu0 0.0
    %393 = vmatpush1.xpose.msra.mxu0 0.0
    %394 = vmatprep.subr.mxu0 0.0
    %395 = vmatpush1.xpose.msra.mxu0 0.0
    %396 = vmatprep.subr.mxu0 0.0
    %397 = vmatpush1.xpose.msra.mxu0 0.0
    %398 = vmatprep.subr.mxu0 0.0
    %399 = vmatpush1.xpose.msra.mxu0 0.0
    %400 = vmatprep.subr.mxu0 0.0
    %401 = vmatpush1.xpose.msra.mxu0 0.0
    %402 = vmatprep.subr.mxu0 0.0
    %403 = vmatpush1.xpose.msra.mxu0 0.0
    %404 = vmatprep.subr.mxu0 0.0
    %405 = vmatpush1.xpose.msra.mxu0 0.0
    %406 = vmatprep.subr.mxu0 0.0
    %407 = vmatpush1.xpose.msra.mxu0 0.0
    %408 = vmatprep.subr.mxu0 0.0
    %409 = vmatpush1.xpose.msra.mxu0 0.0
    %410 = vmatprep.subr.mxu0 0.0
    %411 = vmatpush1.xpose.msra.mxu0 0.0
    %412 = vmatprep.subr.mxu0 0.0
    %413 = vmatpush1.xpose.msra.mxu0 0.0
    %414 = vmatprep.subr.mxu0 0.0
    %415 = vmatpush1.xpose.msra.mxu0 0.0
    %416 = vmatprep.mubr.f32.mxu0 0.0
    %417 = vmatmul.mubr.f32.gmra.mrb[0].mxu0 %v342
    %v418 = vpop.f32.mrb[0].mxu0
    %v419 = vadd.f32 0.0, %v418
    %v420 = vpop.f32.mrb[0].mxu0
    %421 = vdwg.mxu0
    %v422 = vmul.f32 %v326, 0.35355338
    %v423 = vmul.f32 %v419, 0.35355338
    %v424 = vsel %vm52, %v422, -inf
    %v425 = vrot.slane %v424, 4
    %v426 = vmax.f32 %v424, %v425
    %v427 = vrot.slane %v426, 2
    %v428 = vmax.f32 %v426, %v427
    %v429 = vrot.slane %v428, 1
    %v430 = vmax.f32 %v428, %v429
    %v431 = vsel %vm52, %v423, -inf
    %v432 = vrot.slane %v431, 4
    %v433 = vmax.f32 %v431, %v432
    %v434 = vrot.slane %v433, 2
    %v435 = vmax.f32 %v433, %v434
    %v436 = vrot.slane %v435, 1
    %v437 = vmax.f32 %v435, %v436
    %v438 = vsub.f32 %v422, %v430
    %v439 = vsub.f32 %v423, %v437
    %v440 = vmul.f32 %v438, 1.442695
    %v441 = vpow.pop %v440
    %v442 = vmul.f32 %v439, 1.442695
    %v443 = vpow.pop %v442
    %v444 = vsel %vm52, %v441, 0.0
    %v445 = vrot.slane %v444, 4
    %v446 = vadd.f32 %v444, %v445
    %v447 = vrot.slane %v446, 2
    %v448 = vadd.f32 %v446, %v447
    %v449 = vrot.slane %v448, 1
    %v450 = vadd.f32 %v448, %v449
    %v451 = vsel %vm52, %v443, 0.0
    %v452 = vrot.slane %v451, 4
    %v453 = vadd.f32 %v451, %v452
    %v454 = vrot.slane %v453, 2
    %v455 = vadd.f32 %v453, %v454
    %v456 = vrot.slane %v455, 1
    %v457 = vadd.f32 %v455, %v456
    %v458 = vrcp.pop %v450
    %v459 = vrcp.pop %v457
    %v460 = vmul.f32 %v441, %v458
    %v461 = vmul.f32 %v443, %v459
    %466 = vrot.lane.b32.xlu0 %v228, 64
    %v467 = vpop.permute.xlu0 %466
    %468 = vrot.lane.b32.xlu0 %v229, 64
    %v469 = vpop.permute.xlu0 %468
    %470 = vrot.lane.b32.xlu0 %v230, 64
    %v471 = vpop.permute.xlu0 %470
    %472 = vrot.lane.b32.xlu0 %v231, 64
    %v473 = vpop.permute.xlu0 %472
    %v479 = vsel %vm52, %v460, 0
    %481 = vmatprep.subr.mxu0 0.0
    %482 = vmatpush1.msra.mxu0 %v467
    %483 = vmatprep.subr.mxu0 0.0
    %484 = vmatpush1.msra.mxu0 %v469
    %485 = vmatprep.subr.mxu0 0.0
    %486 = vmatpush1.msra.mxu0 %v471
    %487 = vmatprep.subr.mxu0 0.0
    %488 = vmatpush1.msra.mxu0 %v473
    %489 = vmatprep.subr.mxu0 0.0
    %490 = vmatpush1.msra.mxu0 0.0
    %491 = vmatprep.subr.mxu0 0.0
    %492 = vmatpush1.msra.mxu0 0.0
    %493 = vmatprep.subr.mxu0 0.0
    %494 = vmatpush1.msra.mxu0 0.0
    %495 = vmatprep.subr.mxu0 0.0
    %496 = vmatpush1.msra.mxu0 0.0
    %497 = vmatprep.subr.mxu0 0.0
    %498 = vmatpush1.msra.mxu0 0.0
    %499 = vmatprep.subr.mxu0 0.0
    %500 = vmatpush1.msra.mxu0 0.0
    %501 = vmatprep.subr.mxu0 0.0
    %502 = vmatpush1.msra.mxu0 0.0
    %503 = vmatprep.subr.mxu0 0.0
    %504 = vmatpush1.msra.mxu0 0.0
    %505 = vmatprep.subr.mxu0 0.0
    %506 = vmatpush1.msra.mxu0 0.0
    %507 = vmatprep.subr.mxu0 0.0
    %508 = vmatpush1.msra.mxu0 0.0
    %509 = vmatprep.subr.mxu0 0.0
    %510 = vmatpush1.msra.mxu0 0.0
    %511 = vmatprep.subr.mxu0 0.0
    %512 = vmatpush1.msra.mxu0 0.0
    %513 = vmatprep.subr.mxu0 0.0
    %514 = vmatpush1.msra.mxu0 0.0
    %515 = vmatprep.subr.mxu0 0.0
    %516 = vmatpush1.msra.mxu0 0.0
    %517 = vmatprep.subr.mxu0 0.0
    %518 = vmatpush1.msra.mxu0 0.0
    %519 = vmatprep.subr.mxu0 0.0
    %520 = vmatpush1.msra.mxu0 0.0
    %521 = vmatprep.subr.mxu0 0.0
    %522 = vmatpush1.msra.mxu0 0.0
    %523 = vmatprep.subr.mxu0 0.0
    %524 = vmatpush1.msra.mxu0 0.0
    %525 = vmatprep.subr.mxu0 0.0
    %526 = vmatpush1.msra.mxu0 0.0
    %527 = vmatprep.subr.mxu0 0.0
    %528 = vmatpush1.msra.mxu0 0.0
    %529 = vmatprep.subr.mxu0 0.0
    %530 = vmatpush1.msra.mxu0 0.0
    %531 = vmatprep.subr.mxu0 0.0
    %532 = vmatpush1.msra.mxu0 0.0
    %533 = vmatprep.subr.mxu0 0.0
    %534 = vmatpush1.msra.mxu0 0.0
    %535 = vmatprep.subr.mxu0 0.0
    %536 = vmatpush1.msra.mxu0 0.0
    %537 = vmatprep.subr.mxu0 0.0
    %538 = vmatpush1.msra.mxu0 0.0
    %539 = vmatprep.subr.mxu0 0.0
    %540 = vmatpush1.msra.mxu0 0.0
    %541 = vmatprep.subr.mxu0 0.0
    %542 = vmatpush1.msra.mxu0 0.0
    %543 = vmatprep.subr.mxu0 0.0
    %544 = vmatpush1.msra.mxu0 0.0
    %545 = vmatprep.mubr.f32.mxu0 0.0
    %546 = vmatmul.mubr.f32.gmra.mrb[0].mxu0 %v479
    %v547 = vpop.f32.mrb[0].mxu0
    %v548 = vadd.f32 0.0, %v547
    %v549 = vpop.f32.mrb[0].mxu0
    %550 = vdwg.mxu0
    %555 = vrot.lane.b32.xlu0 %v232, 64
    %v556 = vpop.permute.xlu0 %555
    %557 = vrot.lane.b32.xlu0 %v233, 64
    %v558 = vpop.permute.xlu0 %557
    %559 = vrot.lane.b32.xlu0 %v234, 64
    %v560 = vpop.permute.xlu0 %559
    %561 = vrot.lane.b32.xlu0 %v235, 64
    %v562 = vpop.permute.xlu0 %561
    %v568 = vsel %vm52, %v461, 0
    %570 = vmatprep.subr.mxu0 0.0
    %571 = vmatpush1.msra.mxu0 %v556
    %572 = vmatprep.subr.mxu0 0.0
    %573 = vmatpush1.msra.mxu0 %v558
    %574 = vmatprep.subr.mxu0 0.0
    %575 = vmatpush1.msra.mxu0 %v560
    %576 = vmatprep.subr.mxu0 0.0
    %577 = vmatpush1.msra.mxu0 %v562
    %578 = vmatprep.subr.mxu0 0.0
    %579 = vmatpush1.msra.mxu0 0.0
    %580 = vmatprep.subr.mxu0 0.0
    %581 = vmatpush1.msra.mxu0 0.0
    %582 = vmatprep.subr.mxu0 0.0
    %583 = vmatpush1.msra.mxu0 0.0
    %584 = vmatprep.subr.mxu0 0.0
    %585 = vmatpush1.msra.mxu0 0.0
    %586 = vmatprep.subr.mxu0 0.0
    %587 = vmatpush1.msra.mxu0 0.0
    %588 = vmatprep.subr.mxu0 0.0
    %589 = vmatpush1.msra.mxu0 0.0
    %590 = vmatprep.subr.mxu0 0.0
    %591 = vmatpush1.msra.mxu0 0.0
    %592 = vmatprep.subr.mxu0 0.0
    %593 = vmatpush1.msra.mxu0 0.0
    %594 = vmatprep.subr.mxu0 0.0
    %595 = vmatpush1.msra.mxu0 0.0
    %596 = vmatprep.subr.mxu0 0.0
    %597 = vmatpush1.msra.mxu0 0.0
    %598 = vmatprep.subr.mxu0 0.0
    %599 = vmatpush1.msra.mxu0 0.0
    %600 = vmatprep.subr.mxu0 0.0
    %601 = vmatpush1.msra.mxu0 0.0
    %602 = vmatprep.subr.mxu0 0.0
    %603 = vmatpush1.msra.mxu0 0.0
    %604 = vmatprep.subr.mxu0 0.0
    %605 = vmatpush1.msra.mxu0 0.0
    %606 = vmatprep.subr.mxu0 0.0
    %607 = vmatpush1.msra.mxu0 0.0
    %608 = vmatprep.subr.mxu0 0.0
    %609 = vmatpush1.msra.mxu0 0.0
    %610 = vmatprep.subr.mxu0 0.0
    %611 = vmatpush1.msra.mxu0 0.0
    %612 = vmatprep.subr.mxu0 0.0
    %613 = vmatpush1.msra.mxu0 0.0
    %614 = vmatprep.subr.mxu0 0.0
    %615 = vmatpush1.msra.mxu0 0.0
    %616 = vmatprep.subr.mxu0 0.0
    %617 = vmatpush1.msra.mxu0 0.0
    %618 = vmatprep.subr.mxu0 0.0
    %619 = vmatpush1.msra.mxu0 0.0
    %620 = vmatprep.subr.mxu0 0.0
    %621 = vmatpush1.msra.mxu0 0.0
    %622 = vmatprep.subr.mxu0 0.0
    %623 = vmatpush1.msra.mxu0 0.0
    %624 = vmatprep.subr.mxu0 0.0
    %625 = vmatpush1.msra.mxu0 0.0
    %626 = vmatprep.subr.mxu0 0.0
    %627 = vmatpush1.msra.mxu0 0.0
    %628 = vmatprep.subr.mxu0 0.0
    %629 = vmatpush1.msra.mxu0 0.0
    %630 = vmatprep.subr.mxu0 0.0
    %631 = vmatpush1.msra.mxu0 0.0
    %632 = vmatprep.subr.mxu0 0.0
    %633 = vmatpush1.msra.mxu0 0.0
    %634 = vmatprep.mubr.f32.mxu0 0.0
    %635 = vmatmul.mubr.f32.gmra.mrb[0].mxu0 %v568
    %v636 = vpop.f32.mrb[0].mxu0
    %v637 = vadd.f32 0.0, %v636
    %v638 = vpop.f32.mrb[0].mxu0
    %639 = vdwg.mxu0
    %v640 = vld [vmem:[%s6] sm:$0xff]
    %v641 = vld [vmem:[%s6 + $0x8] sm:$0xff]
    %v642 = vld [vmem:[%s6 + $0x10] sm:$0xff]
    %v643 = vld [vmem:[%s6 + $0x18] sm:$0xff]
    %v645 = vsel %vm52, %v548, 0
    %v648 = vsel %vm52, %v637, 0
    %650 = vmatprep.subr.mxu0 0.0
    %651 = vmatpush1.msra.mxu0 %v640
    %652 = vmatprep.subr.mxu0 0.0
    %653 = vmatpush1.msra.mxu0 %v641
    %654 = vmatprep.subr.mxu0 0.0
    %655 = vmatpush1.msra.mxu0 %v642
    %656 = vmatprep.subr.mxu0 0.0
    %657 = vmatpush1.msra.mxu0 %v643
    %658 = vmatprep.subr.mxu0 0.0
    %659 = vmatpush1.msra.mxu0 0.0
    %660 = vmatprep.subr.mxu0 0.0
    %661 = vmatpush1.msra.mxu0 0.0
    %662 = vmatprep.subr.mxu0 0.0
    %663 = vmatpush1.msra.mxu0 0.0
    %664 = vmatprep.subr.mxu0 0.0
    %665 = vmatpush1.msra.mxu0 0.0
    %666 = vmatprep.subr.mxu0 0.0
    %667 = vmatpush1.msra.mxu0 0.0
    %668 = vmatprep.subr.mxu0 0.0
    %669 = vmatpush1.msra.mxu0 0.0
    %670 = vmatprep.subr.mxu0 0.0
    %671 = vmatpush1.msra.mxu0 0.0
    %672 = vmatprep.subr.mxu0 0.0
    %673 = vmatpush1.msra.mxu0 0.0
    %674 = vmatprep.subr.mxu0 0.0
    %675 = vmatpush1.msra.mxu0 0.0
    %676 = vmatprep.subr.mxu0 0.0
    %677 = vmatpush1.msra.mxu0 0.0
    %678 = vmatprep.subr.mxu0 0.0
    %679 = vmatpush1.msra.mxu0 0.0
    %680 = vmatprep.subr.mxu0 0.0
    %681 = vmatpush1.msra.mxu0 0.0
    %682 = vmatprep.subr.mxu0 0.0
    %683 = vmatpush1.msra.mxu0 0.0
    %684 = vmatprep.subr.mxu0 0.0
    %685 = vmatpush1.msra.mxu0 0.0
    %686 = vmatprep.subr.mxu0 0.0
    %687 = vmatpush1.msra.mxu0 0.0
    %688 = vmatprep.subr.mxu0 0.0
    %689 = vmatpush1.msra.mxu0 0.0
    %690 = vmatprep.subr.mxu0 0.0
    %691 = vmatpush1.msra.mxu0 0.0
    %692 = vmatprep.subr.mxu0 0.0
    %693 = vmatpush1.msra.mxu0 0.0
    %694 = vmatprep.subr.mxu0 0.0
    %695 = vmatpush1.msra.mxu0 0.0
    %696 = vmatprep.subr.mxu0 0.0
    %697 = vmatpush1.msra.mxu0 0.0
    %698 = vmatprep.subr.mxu0 0.0
    %699 = vmatpush1.msra.mxu0 0.0
    %700 = vmatprep.subr.mxu0 0.0
    %701 = vmatpush1.msra.mxu0 0.0
    %702 = vmatprep.subr.mxu0 0.0
    %703 = vmatpush1.msra.mxu0 0.0
    %704 = vmatprep.subr.mxu0 0.0
    %705 = vmatpush1.msra.mxu0 0.0
    %706 = vmatprep.subr.mxu0 0.0
    %707 = vmatpush1.msra.mxu0 0.0
    %708 = vmatprep.subr.mxu0 0.0
    %709 = vmatpush1.msra.mxu0 0.0
    %710 = vmatprep.subr.mxu0 0.0
    %711 = vmatpush1.msra.mxu0 0.0
    %712 = vmatprep.subr.mxu0 0.0
    %713 = vmatpush1.msra.mxu0 0.0
    %714 = vmatprep.mubr.f32.mxu0 0.0
    %715 = vmatmul.mubr.f32.gmra.mrb[0].mxu0 %v645
    %v716 = vpop.f32.mrb[0].mxu0
    %v717 = vadd.f32 0.0, %v716
    %v718 = vpop.f32.mrb[0].mxu0
    %719 = vmatprep.mubr.f32.mxu0 0.0
    %720 = vmatmul.mubr.f32.gmra.mrb[0].mxu0 %v648
    %v721 = vpop.f32.mrb[0].mxu0
    %v722 = vadd.f32 0.0, %v721
    %v723 = vpop.f32.mrb[0].mxu0
    %724 = vdwg.mxu0
    %v725 = vadd.f32 %v48, %v717
    %v726 = vadd.f32 %v49, %v722
    %v727 = vld [vmem:[%s7] sm:$0x1]
    %v729 = vlaneseq
    %v730 = vshrl.u32 %v729, 7
    %v731 = vsub.s32 0, %v730
    %v732 = vrot.slane %v727, %v731
    %v734 = vadd.f32 %v725, %v732
    %v735 = vadd.f32 %v726, %v732
    %v736 = vld [vmem:[%s8] sm:$0x1]
    %v737 = vld [vmem:[%s9] sm:$0x1]
    %v738 = vsel %vm52, %v734, 0.0
    %739 = vadd.xlane.f32.xlu0 %v738
    %v740 = vpop.xlane.xlu0 %739
    %v741 = vsel %vm52, %v735, 0.0
    %742 = vadd.xlane.f32.xlu0 %v741
    %v743 = vpop.xlane.xlu0 %742
    %v744 = vmul.f32 %v740, %v59
    %v745 = vmul.f32 %v743, %v59
    %v746 = vsub.f32 %v734, %v744
    %v747 = vsub.f32 %v735, %v745
    %v748 = vmul.f32 %v746, %v746
    %v749 = vmul.f32 %v747, %v747
    %v750 = vsel %vm52, %v748, 0.0
    %751 = vadd.xlane.f32.xlu0 %v750
    %v752 = vpop.xlane.xlu0 %751
    %v753 = vsel %vm52, %v749, 0.0
    %754 = vadd.xlane.f32.xlu0 %v753
    %v755 = vpop.xlane.xlu0 %754
    %v756 = vmul.f32 %v752, %v59
    %v757 = vmul.f32 %v755, %v59
    %v758 = vadd.f32 %v756, 1e-05
    %v759 = vadd.f32 %v757, 1e-05
    %v760 = vrsqrt.pop %v758
    %v761 = vrsqrt.pop %v759
    %v762 = vmul.f32 %v746, %v760
    %v763 = vmul.f32 %v747, %v761
    %v765 = vlaneseq
    %v766 = vshrl.u32 %v765, 7
    %v767 = vsub.s32 0, %v766
    %v768 = vrot.slane %v736, %v767
    %v770 = vmul.f32 %v762, %v768
    %v771 = vmul.f32 %v763, %v768
    %v773 = vlaneseq
    %v774 = vshrl.u32 %v773, 7
    %v775 = vsub.s32 0, %v774
    %v776 = vrot.slane %v737, %v775
    %v778 = vadd.f32 %v770, %v776
    %v779 = vadd.f32 %v771, %v776
    %v780 = vld [vmem:[%s10] sm:$0xff]
    %v781 = vld [vmem:[%s10 + $0x8] sm:$0xff]
    %v782 = vld [vmem:[%s10 + $0x10] sm:$0xff]
    %v783 = vld [vmem:[%s10 + $0x18] sm:$0xff]
    %v784 = vld [vmem:[%s11] sm:$0x1]
    %v786 = vlaneseq
    %v787 = vshrl.u32 %v786, 7
    %v788 = vsub.s32 0, %v787
    %v789 = vrot.slane %v784, %v788
    %v792 = vsel %vm52, %v778, 0
    %v795 = vsel %vm52, %v779, 0
    %797 = vmatprep.subr.mxu0 0.0
    %798 = vmatpush1.msra.mxu0 %v780
    %799 = vmatprep.subr.mxu0 0.0
    %800 = vmatpush1.msra.mxu0 %v781
    %801 = vmatprep.subr.mxu0 0.0
    %802 = vmatpush1.msra.mxu0 %v782
    %803 = vmatprep.subr.mxu0 0.0
    %804 = vmatpush1.msra.mxu0 %v783
    %805 = vmatprep.subr.mxu0 0.0
    %806 = vmatpush1.msra.mxu0 0.0
    %807 = vmatprep.subr.mxu0 0.0
    %808 = vmatpush1.msra.mxu0 0.0
    %809 = vmatprep.subr.mxu0 0.0
    %810 = vmatpush1.msra.mxu0 0.0
    %811 = vmatprep.subr.mxu0 0.0
    %812 = vmatpush1.msra.mxu0 0.0
    %813 = vmatprep.subr.mxu0 0.0
    %814 = vmatpush1.msra.mxu0 0.0
    %815 = vmatprep.subr.mxu0 0.0
    %816 = vmatpush1.msra.mxu0 0.0
    %817 = vmatprep.subr.mxu0 0.0
    %818 = vmatpush1.msra.mxu0 0.0
    %819 = vmatprep.subr.mxu0 0.0
    %820 = vmatpush1.msra.mxu0 0.0
    %821 = vmatprep.subr.mxu0 0.0
    %822 = vmatpush1.msra.mxu0 0.0
    %823 = vmatprep.subr.mxu0 0.0
    %824 = vmatpush1.msra.mxu0 0.0
    %825 = vmatprep.subr.mxu0 0.0
    %826 = vmatpush1.msra.mxu0 0.0
    %827 = vmatprep.subr.mxu0 0.0
    %828 = vmatpush1.msra.mxu0 0.0
    %829 = vmatprep.subr.mxu0 0.0
    %830 = vmatpush1.msra.mxu0 0.0
    %831 = vmatprep.subr.mxu0 0.0
    %832 = vmatpush1.msra.mxu0 0.0
    %833 = vmatprep.subr.mxu0 0.0
    %834 = vmatpush1.msra.mxu0 0.0
    %835 = vmatprep.subr.mxu0 0.0
    %836 = vmatpush1.msra.mxu0 0.0
    %837 = vmatprep.subr.mxu0 0.0
    %838 = vmatpush1.msra.mxu0 0.0
    %839 = vmatprep.subr.mxu0 0.0
    %840 = vmatpush1.msra.mxu0 0.0
    %841 = vmatprep.subr.mxu0 0.0
    %842 = vmatpush1.msra.mxu0 0.0
    %843 = vmatprep.subr.mxu0 0.0
    %844 = vmatpush1.msra.mxu0 0.0
    %845 = vmatprep.subr.mxu0 0.0
    %846 = vmatpush1.msra.mxu0 0.0
    %847 = vmatprep.subr.mxu0 0.0
    %848 = vmatpush1.msra.mxu0 0.0
    %849 = vmatprep.subr.mxu0 0.0
    %850 = vmatpush1.msra.mxu0 0.0
    %851 = vmatprep.subr.mxu0 0.0
    %852 = vmatpush1.msra.mxu0 0.0
    %853 = vmatprep.subr.mxu0 0.0
    %854 = vmatpush1.msra.mxu0 0.0
    %855 = vmatprep.subr.mxu0 0.0
    %856 = vmatpush1.msra.mxu0 0.0
    %857 = vmatprep.subr.mxu0 0.0
    %858 = vmatpush1.msra.mxu0 0.0
    %859 = vmatprep.subr.mxu0 0.0
    %860 = vmatpush1.msra.mxu0 0.0
    %861 = vmatprep.mubr.f32.mxu0 0.0
    %862 = vmatmul.mubr.f32.gmra.mrb[0].mxu0 %v792
    %v863 = vpop.f32.mrb[0].mxu0
    %v864 = vadd.f32 %v789, %v863
    %v865 = vpop.f32.mrb[0].mxu0
    %866 = vmatprep.mubr.f32.mxu0 0.0
    %867 = vmatmul.mubr.f32.gmra.mrb[0].mxu0 %v795
    %v868 = vpop.f32.mrb[0].mxu0
    %v869 = vadd.f32 %v789, %v868
    %v870 = vpop.f32.mrb[0].mxu0
    %871 = vdwg.mxu0
    %v872 = vmul.f32 %v864, 0.5
    %v873 = vmul.f32 %v869, 0.5
    %v874 = vmul.f32 %v864, 0.70710677
    %v875 = vmul.f32 %v869, 0.70710677
    %v876 = verf.f32.pop %v874
    %v877 = verf.f32.pop %v875
    %v878 = vadd.f32 %v876, 1.0
    %v879 = vadd.f32 %v877, 1.0
    %v880 = vmul.f32 %v872, %v878
    %v881 = vmul.f32 %v873, %v879
    %v882 = vld [vmem:[%s12] sm:$0xff]
    %v883 = vld [vmem:[%s12 + $0x8] sm:$0xff]
    %v884 = vld [vmem:[%s12 + $0x10] sm:$0xff]
    %v885 = vld [vmem:[%s12 + $0x18] sm:$0xff]
    %v886 = vld [vmem:[%s12 + $0x20] sm:$0xff]
    %v887 = vld [vmem:[%s12 + $0x28] sm:$0xff]
    %v888 = vld [vmem:[%s12 + $0x30] sm:$0xff]
    %v889 = vld [vmem:[%s12 + $0x38] sm:$0xff]
    %v890 = vld [vmem:[%s12 + $0x40] sm:$0xff]
    %v891 = vld [vmem:[%s12 + $0x48] sm:$0xff]
    %v892 = vld [vmem:[%s12 + $0x50] sm:$0xff]
    %v893 = vld [vmem:[%s12 + $0x58] sm:$0xff]
    %v894 = vld [vmem:[%s12 + $0x60] sm:$0xff]
    %v895 = vld [vmem:[%s12 + $0x68] sm:$0xff]
    %v896 = vld [vmem:[%s12 + $0x70] sm:$0xff]
    %v897 = vld [vmem:[%s12 + $0x78] sm:$0xff]
    %v898 = vld [vmem:[%s13] sm:$0x1]
    %v900 = vlaneseq
    %v901 = vshrl.u32 %v900, 7
    %v902 = vsub.s32 0, %v901
    %v903 = vrot.slane %v898, %v902
    %905 = vmatprep.subr.mxu0 0.0
    %906 = vmatpush1.msra.mxu0 %v882
    %907 = vmatprep.subr.mxu0 0.0
    %908 = vmatpush1.msra.mxu0 %v883
    %909 = vmatprep.subr.mxu0 0.0
    %910 = vmatpush1.msra.mxu0 %v884
    %911 = vmatprep.subr.mxu0 0.0
    %912 = vmatpush1.msra.mxu0 %v885
    %913 = vmatprep.subr.mxu0 0.0
    %914 = vmatpush1.msra.mxu0 %v886
    %915 = vmatprep.subr.mxu0 0.0
    %916 = vmatpush1.msra.mxu0 %v887
    %917 = vmatprep.subr.mxu0 0.0
    %918 = vmatpush1.msra.mxu0 %v888
    %919 = vmatprep.subr.mxu0 0.0
    %920 = vmatpush1.msra.mxu0 %v889
    %921 = vmatprep.subr.mxu0 0.0
    %922 = vmatpush1.msra.mxu0 %v890
    %923 = vmatprep.subr.mxu0 0.0
    %924 = vmatpush1.msra.mxu0 %v891
    %925 = vmatprep.subr.mxu0 0.0
    %926 = vmatpush1.msra.mxu0 %v892
    %927 = vmatprep.subr.mxu0 0.0
    %928 = vmatpush1.msra.mxu0 %v893
    %929 = vmatprep.subr.mxu0 0.0
    %930 = vmatpush1.msra.mxu0 %v894
    %931 = vmatprep.subr.mxu0 0.0
    %932 = vmatpush1.msra.mxu0 %v895
    %933 = vmatprep.subr.mxu0 0.0
    %934 = vmatpush1.msra.mxu0 %v896
    %935 = vmatprep.subr.mxu0 0.0
    %936 = vmatpush1.msra.mxu0 %v897
    %937 = vmatprep.subr.mxu0 0.0
    %938 = vmatpush1.msra.mxu0 0.0
    %939 = vmatprep.subr.mxu0 0.0
    %940 = vmatpush1.msra.mxu0 0.0
    %941 = vmatprep.subr.mxu0 0.0
    %942 = vmatpush1.msra.mxu0 0.0
    %943 = vmatprep.subr.mxu0 0.0
    %944 = vmatpush1.msra.mxu0 0.0
    %945 = vmatprep.subr.mxu0 0.0
    %946 = vmatpush1.msra.mxu0 0.0
    %947 = vmatprep.subr.mxu0 0.0
    %948 = vmatpush1.msra.mxu0 0.0
    %949 = vmatprep.subr.mxu0 0.0
    %950 = vmatpush1.msra.mxu0 0.0
    %951 = vmatprep.subr.mxu0 0.0
    %952 = vmatpush1.msra.mxu0 0.0
    %953 = vmatprep.subr.mxu0 0.0
    %954 = vmatpush1.msra.mxu0 0.0
    %955 = vmatprep.subr.mxu0 0.0
    %956 = vmatpush1.msra.mxu0 0.0
    %957 = vmatprep.subr.mxu0 0.0
    %958 = vmatpush1.msra.mxu0 0.0
    %959 = vmatprep.subr.mxu0 0.0
    %960 = vmatpush1.msra.mxu0 0.0
    %961 = vmatprep.subr.mxu0 0.0
    %962 = vmatpush1.msra.mxu0 0.0
    %963 = vmatprep.subr.mxu0 0.0
    %964 = vmatpush1.msra.mxu0 0.0
    %965 = vmatprep.subr.mxu0 0.0
    %966 = vmatpush1.msra.mxu0 0.0
    %967 = vmatprep.subr.mxu0 0.0
    %968 = vmatpush1.msra.mxu0 0.0
    %969 = vmatprep.mubr.f32.mxu0 0.0
    %970 = vmatmul.mubr.f32.gmra.mrb[0].mxu0 %v880
    %v971 = vpop.f32.mrb[0].mxu0
    %v972 = vadd.f32 %v903, %v971
    %v973 = vpop.f32.mrb[0].mxu0
    %974 = vmatprep.mubr.f32.mxu0 0.0
    %975 = vmatmul.mubr.f32.gmra.mrb[0].mxu0 %v881
    %v976 = vpop.f32.mrb[0].mxu0
    %v977 = vadd.f32 %v903, %v976
    %v978 = vpop.f32.mrb[0].mxu0
    %979 = vdwg.mxu0
    %v980 = vadd.f32 %v734, %v972
    %v981 = vadd.f32 %v735, %v977
    %982 = vst.msk [vmem:[#allocation2] sm:$0xff] %vm52, %v980
    %983 = vst.msk [vmem:[#allocation2 + $0x8] sm:$0xff] %vm52, %v981
    // Predicated region
    $region58: #{tpu_custom_call.1} parent=1 // pred_check
      _
    $region59: #{tpu_custom_call.1} parent=1 // pred_check_branch
      %985 = sbr.rel (0) target = $region61
    $region60: #{tpu_custom_call.1} parent=1 // pred_region
      %s987 = ssub.s32 256, 256
      %988 = vsyncadd [#allocation3], %s987
      %s989 = sshll.u32 [#allocation2], 4
      %s990 = int_to_ptr.vmem [resolvable:$true] %s989
      %995 = dma.vmem_to_hbm [thread:$0]  %s990, 256, %s14, [#allocation3], 128, 128, 8
    $region61: #{tpu_custom_call.1} parent=1 // pred_fallthru
      _
    // Predicated region
    $region62: #{tpu_custom_call.1} parent=1 // pred_check
      _
    $region63: #{tpu_custom_call.1} parent=1 // pred_check_branch
      %997 = sbr.rel (0) target = $region65
    $region64: #{tpu_custom_call.1} parent=1 // pred_region
      %998 = dma.done [#allocation3], 256
    $region65: #{tpu_custom_call.1} parent=1 // pred_fallthru
      _
    %999 = vsyncpa [#allocation3], 1

</llo_original>
